<compile_context>
chip_gen: v5e
topology: v5e:2x2
jax: 0.10.0
libtpu: 0.0.40
codegen_flags: <defaults>
</compile_context>

<pallas_src>
import math
import functools

import jax
import jax.numpy as jnp
from jax.experimental import pallas as pl
from jax.experimental.pallas import tpu as pltpu

_LANE = 128


def _round_up(x, m):
    return ((x + m - 1) // m) * m


# ---------------------------------------------------------------------------
# Kernel 1: sup[:, :P] = x_ori @ W_pad ; sup[:, P:] = x_aug @ W_pad
# ---------------------------------------------------------------------------
def _support_kernel(x_ori_ref, x_aug_ref, w_ref, sup_ref, *, p: int):
    w = w_ref[...]
    # Two slice stores at 128-aligned lane offsets (no concatenate copy).
    sup_ref[:, :p] = jnp.dot(x_ori_ref[...], w, preferred_element_type=jnp.float32)
    sup_ref[:, p:] = jnp.dot(x_aug_ref[...], w, preferred_element_type=jnp.float32)


# ---------------------------------------------------------------------------
# Kernel 2: stream adj (TM, TK) tiles, accumulate over k, bias+relu at k==last.
#   out_ori = relu(adj @ sup[:, :P] + bias) ; out_aug = relu(adj @ sup[:, P:] + bias)
# ---------------------------------------------------------------------------
def _aggregate_kernel(adj_ref, sup_ref, bias_ref, out_ori_ref, out_aug_ref,
                      acc_ref, *, p: int):
    k = pl.program_id(1)

    @pl.when(k == 0)
    def _():
        acc_ref[...] = jnp.zeros_like(acc_ref)

    adj_tile = adj_ref[...].astype(jnp.float32)      # adj may live in HBM as bf16
    acc_ref[...] += jnp.dot(adj_tile, sup_ref[...],
                            preferred_element_type=jnp.float32)

    @pl.when(k == pl.num_programs(1) - 1)
    def _():
        b = bias_ref[...]                            # (1, P) broadcasts over rows
        acc = acc_ref[...]
        out_ori_ref[...] = jnp.maximum(acc[:, :p] + b, 0.0).astype(out_ori_ref.dtype)
        out_aug_ref[...] = jnp.maximum(acc[:, p:] + b, 0.0).astype(out_aug_ref.dtype)


def graph_deconvolution(feature_ori, feature_aug, adjacency, weight, bias=None,
                        *, tm=256, tk=512):
    """Pallas forward for GraphDeConvolution.

    feature_ori, feature_aug : [N, F_in] f32
    adjacency                : [N, N] dense (f32 or bf16; bf16 halves HBM traffic)
    weight                   : [F_in, F_out]
    bias                     : [F_out] or None
    Returns (out_ori, out_aug), each [N, F_out] = relu(adj @ (x @ W) (+ bias)).
    """
    n, f_in = feature_ori.shape
    assert feature_aug.shape == (n, f_in)
    f_out = weight.shape[1]
    out_dtype = feature_ori.dtype

    # --- lane-dense padding of the output-feature axis ---
    p = _round_up(f_out, _LANE)
    w_pad = jnp.zeros((f_in, p), weight.dtype).at[:, :f_out].set(weight)
    if bias is None:
        bias_pad = jnp.zeros((1, p), jnp.float32)    # relu is still applied (spec)
    else:
        bias_pad = jnp.zeros((1, p), jnp.float32).at[0, :f_out].set(
            bias.astype(jnp.float32))

    # --- tile sizes & padding of the node axis ---
    # For very large N on v5e/v7x (64 MiB VMEM), shrink tm/tk if needed.
    tm = _round_up(min(tm, _round_up(n, 8)), 8)          # adj row tile
    tk = _round_up(min(tk, _round_up(n, _LANE)), _LANE)  # adj col / reduction tile
    n_rows = _round_up(n, tm)                            # adj rows / output rows
    n_cols = _round_up(n, tk)                            # adj cols / support rows

    adj_pad = jnp.zeros((n_rows, n_cols), adjacency.dtype).at[:n, :n].set(adjacency)

    def pad_rows(x, rows):
        return jnp.zeros((rows, x.shape[1]), x.dtype).at[:x.shape[0]].set(x)

    x_ori = pad_rows(feature_ori, n_cols)
    x_aug = pad_rows(feature_aug, n_cols)

    # --- kernel 1: fused support for both inputs -> [n_cols, 2P] ---
    sup = pl.pallas_call(
        functools.partial(_support_kernel, p=p),
        out_shape=jax.ShapeDtypeStruct((n_cols, 2 * p), jnp.float32),
        grid=(n_cols // tk,),
        in_specs=[
            pl.BlockSpec((tk, f_in), lambda i: (i, 0)),
            pl.BlockSpec((tk, f_in), lambda i: (i, 0)),
            pl.BlockSpec((f_in, p), lambda i: (0, 0)),
        ],
        out_specs=pl.BlockSpec((tk, 2 * p), lambda i: (i, 0)),
        compiler_params=pltpu.CompilerParams(dimension_semantics=("parallel",)),
    )(x_ori, x_aug, w_pad)

    # --- kernel 2: tiled adjacency aggregation + bias + relu ---
    grid = (n_rows // tm, n_cols // tk)
    cost = pl.CostEstimate(
        flops=2 * n_rows * n_cols * 2 * p,
        transcendentals=0,
        bytes_accessed=(adj_pad.size * adj_pad.dtype.itemsize
                        + (n_rows // tm) * n_cols * 2 * p * 4
                        + 2 * n_rows * p * out_dtype.itemsize),
    )
    out_ori, out_aug = pl.pallas_call(
        functools.partial(_aggregate_kernel, p=p),
        out_shape=(jax.ShapeDtypeStruct((n_rows, p), out_dtype),
                   jax.ShapeDtypeStruct((n_rows, p), out_dtype)),
        grid=grid,
        in_specs=[
            pl.BlockSpec((tm, tk), lambda i, k: (i, k)),      # adj tile (streamed)
            pl.BlockSpec((tk, 2 * p), lambda i, k: (k, 0)),   # support k-slab
            pl.BlockSpec((1, p), lambda i, k: (0, 0)),        # bias (resident)
        ],
        out_specs=(pl.BlockSpec((tm, p), lambda i, k: (i, 0)),
                   pl.BlockSpec((tm, p), lambda i, k: (i, 0))),
        scratch_shapes=[pltpu.VMEM((tm, 2 * p), jnp.float32)],
        compiler_params=pltpu.CompilerParams(
            dimension_semantics=("parallel", "arbitrary")),
        cost_estimate=cost,
    )(adj_pad, sup, bias_pad)

    return out_ori[:n, :f_out], out_aug[:n, :f_out]


def init_params(key, in_features, out_features, bias=True):
    """Mirror reset_parameters(): kaiming_uniform_ weight (torch fan_in=size(1)),
    zeros bias."""
    bound = math.sqrt(6.0 / out_features)
    kw, _ = jax.random.split(key)
    weight = jax.random.uniform(kw, (in_features, out_features),
                                minval=-bound, maxval=bound, dtype=jnp.float32)
    b = jnp.zeros((out_features,), jnp.float32) if bias else None
    return weight, b


if __name__ == "__main__":
    key = jax.random.PRNGKey(0)
    k1, k2, k3, kp = jax.random.split(key, 4)

    N, F_IN, F_OUT = 256, 64, 16

    x_ori = jax.random.normal(k1, (N, F_IN), dtype=jnp.float32)
    x_aug = x_ori + 0.1 * jax.random.normal(k2, (N, F_IN), dtype=jnp.float32)

    # Symmetric row-normalized dense adjacency (deterministic).
    adj_raw = (jax.random.uniform(k3, (N, N)) < 0.05).astype(jnp.float32)
    adj = adj_raw + adj_raw.T + jnp.eye(N, dtype=jnp.float32)
    deg = jnp.clip(adj.sum(axis=1, keepdims=True), 1.0, None)
    adj = adj / deg

    weight, bias = init_params(kp, F_IN, F_OUT, bias=True)

    # bf16 adjacency: halves HBM traffic of the dominant operand (accumulation
    # and the dot itself stay f32, matching the reference exactly).
    adj_bf16 = adj.astype(jnp.bfloat16)

    # tm=128, tk=128 -> grid (2, 2): exercises row tiling AND the k accumulator.
    out_ori, out_aug = graph_deconvolution(
        x_ori, x_aug, adj_bf16, weight, bias, tm=128, tk=128)
    out_ori, out_aug = jax.block_until_ready((out_ori, out_aug))

    # Pure-JAX reference using the identical (bf16-rounded) adjacency.
    adj_ref = adj_bf16.astype(jnp.float32)
    ref_ori = jnp.maximum(adj_ref @ (x_ori @ weight) + bias, 0.0)
    ref_aug = jnp.maximum(adj_ref @ (x_aug @ weight) + bias, 0.0)

    assert out_ori.shape == (N, F_OUT) and out_aug.shape == (N, F_OUT)
    assert jnp.allclose(out_ori, ref_ori, atol=1e-4, rtol=1e-4)
    assert jnp.allclose(out_aug, ref_aug, atol=1e-4, rtol=1e-4)

    print("KERNEL_OK")
</pallas_src>

<mosaic_0001>
module attributes {stable_mosaic.version = 11 : i64} {
  func.func @_support_kernel(%arg0: i32, %arg1: memref<128x64xf32, #tpu.memory_space<vmem>>, %arg2: memref<128x64xf32, #tpu.memory_space<vmem>>, %arg3: memref<64x128xf32, #tpu.memory_space<vmem>>, %arg4: memref<128x256xf32, #tpu.memory_space<vmem>>) attributes {dimension_semantics = [#tpu.dimension_semantics<parallel>], iteration_bounds = array<i64: 2>, scalar_prefetch = 0 : i64, scratch_operands = 0 : i64, tpu.core_type = #tpu.core_type<tc>, window_params = [{transform_indices = @transform_0, window_bounds = array<i64: 128, 64>}, {transform_indices = @transform_1, window_bounds = array<i64: 128, 64>}, {pipeline_mode = #tpu.pipeline_mode<synchronous>, transform_indices = @transform_2, window_bounds = array<i64: 64, 128>}, {transform_indices = @transform_3, window_bounds = array<i64: 128, 256>}]} {
    %c0 = arith.constant 0 : index
    %c0_0 = arith.constant 0 : index
    %0 = vector.load %arg3[%c0, %c0_0] : memref<64x128xf32, #tpu.memory_space<vmem>>, vector<64x128xf32>
    %c0_1 = arith.constant 0 : index
    %c0_2 = arith.constant 0 : index
    %1 = vector.load %arg1[%c0_1, %c0_2] : memref<128x64xf32, #tpu.memory_space<vmem>>, vector<128x64xf32>
    %cst = arith.constant dense<0.000000e+00> : vector<128x128xf32>
    %2 = tpu.matmul %1, %0, %cst {dimension_numbers = #tpu.dot_dimension_numbers<[1], [0], [0], [1], [0, 0, 1, 1], [], []>} : vector<128x64xf32>, vector<64x128xf32>, vector<128x128xf32> -> vector<128x128xf32>
    %c0_3 = arith.constant 0 : index
    %c0_4 = arith.constant 0 : index
    %3 = vector.load %arg4[%c0_3, %c0_4] : memref<128x256xf32, #tpu.memory_space<vmem>>, vector<128x128xf32>
    tpu.vector_store %arg4[%c0_3, %c0_4], %2 {strides = array<i32>} : memref<128x256xf32, #tpu.memory_space<vmem>>, vector<128x128xf32>,
    %c0_5 = arith.constant 0 : index
    %c0_6 = arith.constant 0 : index
    %4 = vector.load %arg2[%c0_5, %c0_6] : memref<128x64xf32, #tpu.memory_space<vmem>>, vector<128x64xf32>
    %cst_7 = arith.constant dense<0.000000e+00> : vector<128x128xf32>
    %5 = tpu.matmul %4, %0, %cst_7 {dimension_numbers = #tpu.dot_dimension_numbers<[1], [0], [0], [1], [0, 0, 1, 1], [], []>} : vector<128x64xf32>, vector<64x128xf32>, vector<128x128xf32> -> vector<128x128xf32>
    %c0_8 = arith.constant 0 : index
    %c128 = arith.constant 128 : index
    %6 = vector.load %arg4[%c0_8, %c128] : memref<128x256xf32, #tpu.memory_space<vmem>>, vector<128x128xf32>
    tpu.vector_store %arg4[%c0_8, %c128], %5 {strides = array<i32>} : memref<128x256xf32, #tpu.memory_space<vmem>>, vector<128x128xf32>,
    return
  }
  func.func @transform_0(%arg0: i32) -> (i32, i32) {
    %c0_i32 = arith.constant 0 : i32
    %c0_i32_0 = arith.constant 0 : i32
    return %arg0, %c0_i32 : i32, i32
  }
  func.func @transform_1(%arg0: i32) -> (i32, i32) {
    %c0_i32 = arith.constant 0 : i32
    %c0_i32_0 = arith.constant 0 : i32
    return %arg0, %c0_i32 : i32, i32
  }
  func.func @transform_2(%arg0: i32) -> (i32, i32) {
    %c0_i32 = arith.constant 0 : i32
    %c0_i32_0 = arith.constant 0 : i32
    %c0_i32_1 = arith.constant 0 : i32
    return %c0_i32, %c0_i32_0 : i32, i32
  }
  func.func @transform_3(%arg0: i32) -> (i32, i32) {
    %c0_i32 = arith.constant 0 : i32
    %c0_i32_0 = arith.constant 0 : i32
    return %arg0, %c0_i32 : i32, i32
  }
}

</mosaic_0001>

<llo_original>
// kernel: tpu_custom_call.1
$region0: #{tpu_custom_call.1}
  #allocation0 [shape = 'u32[]', space=smem, size = 0x4, offset = 0x4, fixed_abs, tag = 'smem constant byte address 0x4 - core index']
  #allocation1 [shape = 'u32[72,128]{1,0:T(1,128)}', space=vmem, size = 0x9000, scoped, tag = 'internal scratch']
  %s0 = inlined_call_operand.vmem [shape: f32[256,64], index: 0, kind: input, shape index: {}]
  %s1 = inlined_call_operand.vmem [shape: f32[256,64], index: 1, kind: input, shape index: {}]
  %s2 = inlined_call_operand.vmem [shape: f32[64,128], index: 2, kind: input, shape index: {}]
  %s3 = inlined_call_operand.hbm [shape: f32[256,256], index: 3, kind: output, shape index: {}]
  %s4 = sld [smem:[#allocation0]]
  $region45: #{tpu_custom_call.1} parent=0
    _
  %s6 = ssub.s32 1, %s4
  %s7 = scalar_select 0, %s6, %s4
  $region1: #{tpu_custom_call.1} parent=0
    #allocation2 [shape = 'u8[262144]{0}', space=vmem, size = 0x40000, scoped, tag = 'output window, operand 0']
    #allocation3 [shape = 's32[2]{0}', space=sflag, size = 0x8, scoped, tag = 'scoped memory for tpu_custom_call.1']
    %8 = vsyncpa [#allocation3], 0
    %s9 = scalar_lea.sflag [#allocation3], 1
    %10 = vsyncpa %s9, 0
    loop: start=0, step=1, limit=4
    $region2: #{tpu_custom_call.1} parent=1 // loop_pre_header
      _
    $region3: #{tpu_custom_call.1} parent=1 // loop_header
      %s12 = sphi 0, %s16
      %p13 = scmp.ge.s32.totalorder %s12, 4
      %s22 = sphi 0, %s24
      %s25 = sphi 0, %s22
      %s26 = sphi 0, %s25
      %s42 = sphi 0, %s26
      %s48 = sphi 0, %s50
      %s51 = sphi 0, %s48
      %s52 = sphi 0, %s51
      %s68 = sphi 0, %s52
      %s72 = sphi 0, %s72
      %s74 = sphi 0, %s72
      %s75 = sphi 0, %s74
      %s89 = sphi 0, %s75
      %s95 = sphi 0, %s97
      %s98 = sphi 0, %s95
      %s99 = sphi 0, %s98
      %s115 = sphi 0, %s99
    $region4: #{tpu_custom_call.1} parent=1 // loop_header_branch
      %15 = sbr.rel (%p13) target = $region8
    $region5: #{tpu_custom_call.1} parent=1 // loop_body
      %s17 = ssub.s32 %s12, 1
      %s18 = ssub.s32 %s12, 2
      %s19 = sadd.s32 %s12, 1
      %s20 = ssub.s32 %s12, %s19
      %p21 = scmp.eq.s32.totalorder %s20, 0
      %s23 = sadd.s32 %s22, 1
      %s24 = scalar_select %p21, %s22, %s23
      %p27 = pneg %p21
      %p28 = scmp.eq.s32.totalorder %s12, 1
      %p29 = por %p27, %p28
      %p30 = scmp.ne.s32.totalorder %s22, %s25
      %p31 = scmp.eq.s32.totalorder %s12, 0
      %p32 = por %p30, %p31
      %p33 = scmp.ne.s32.totalorder %s22, %s25
      %p34 = scmp.eq.s32.totalorder %s17, 1
      %p35 = por %p33, %p34
      %p36 = scmp.ne.s32.totalorder %s25, %s26
      %p37 = scmp.eq.s32.totalorder %s17, 0
      %p38 = por %p36, %p37
      %p39 = scmp.ne.s32.totalorder %s25, %s26
      %p40 = scmp.eq.s32.totalorder %s18, 1
      %p41 = por %p39, %p40
      %p43 = scmp.ne.s32.totalorder %s26, %s42
      %p44 = scmp.eq.s32.totalorder %s18, 0
      %p45 = por %p43, %p44
      %s46 = ssub.s32 %s12, %s19
      %p47 = scmp.eq.s32.totalorder %s46, 0
      %s49 = sadd.s32 %s48, 1
      %s50 = scalar_select %p47, %s48, %s49
      %p53 = pneg %p47
      %p54 = scmp.eq.s32.totalorder %s12, 1
      %p55 = por %p53, %p54
      %p56 = scmp.ne.s32.totalorder %s48, %s51
      %p57 = scmp.eq.s32.totalorder %s12, 0
      %p58 = por %p56, %p57
      %p59 = scmp.ne.s32.totalorder %s48, %s51
      %p60 = scmp.eq.s32.totalorder %s17, 1
      %p61 = por %p59, %p60
      %p62 = scmp.ne.s32.totalorder %s51, %s52
      %p63 = scmp.eq.s32.totalorder %s17, 0
      %p64 = por %p62, %p63
      %p65 = scmp.ne.s32.totalorder %s51, %s52
      %p66 = scmp.eq.s32.totalorder %s18, 1
      %p67 = por %p65, %p66
      %p69 = scmp.ne.s32.totalorder %s52, %s68
      %p70 = scmp.eq.s32.totalorder %s18, 0
      %p71 = por %p69, %p70
      %s73 = sadd.s32 %s72, 1
      %p76 = scmp.eq.s32.totalorder %s12, 1
      %p77 = scmp.ne.s32.totalorder %s72, %s74
      %p78 = scmp.eq.s32.totalorder %s12, 0
      %p79 = por %p77, %p78
      %p80 = scmp.ne.s32.totalorder %s72, %s74
      %p81 = scmp.eq.s32.totalorder %s17, 1
      %p82 = por %p80, %p81
      %p83 = scmp.ne.s32.totalorder %s74, %s75
      %p84 = scmp.eq.s32.totalorder %s17, 0
      %p85 = por %p83, %p84
      %p86 = scmp.ne.s32.totalorder %s74, %s75
      %p87 = scmp.eq.s32.totalorder %s18, 1
      %p88 = por %p86, %p87
      %p90 = scmp.ne.s32.totalorder %s75, %s89
      %p91 = scmp.eq.s32.totalorder %s18, 0
      %p92 = por %p90, %p91
      %s93 = ssub.s32 %s12, %s19
      %p94 = scmp.eq.s32.totalorder %s93, 0
      %s96 = sadd.s32 %s95, 1
      %s97 = scalar_select %p94, %s95, %s96
      %p100 = pneg %p94
      %p101 = scmp.eq.s32.totalorder %s12, 1
      %p102 = por %p100, %p101
      %p103 = scmp.ne.s32.totalorder %s95, %s98
      %p104 = scmp.eq.s32.totalorder %s12, 0
      %p105 = por %p103, %p104
      %p106 = scmp.ne.s32.totalorder %s95, %s98
      %p107 = scmp.eq.s32.totalorder %s17, 1
      %p108 = por %p106, %p107
      %p109 = scmp.ne.s32.totalorder %s98, %s99
      %p110 = scmp.eq.s32.totalorder %s17, 0
      %p111 = por %p109, %p110
      %p112 = scmp.ne.s32.totalorder %s98, %s99
      %p113 = scmp.eq.s32.totalorder %s18, 1
      %p114 = por %p112, %p113
      %p116 = scmp.ne.s32.totalorder %s99, %s115
      %p117 = scmp.eq.s32.totalorder %s18, 0
      %p118 = por %p116, %p117
      %p119 = scmp.le.s32.totalorder 1, %s12
      %p120 = scmp.lt.s32.totalorder %s12, 3
      %p121 = pnand %p119, %p120
      %p122 = pneg %p121
      // Predicated region
      $region9: #{tpu_custom_call.1} parent=5 // pred_check
        _
      $region10: #{tpu_custom_call.1} parent=5 // pred_check_branch
        %124 = sbr.rel (%p121) target = $region12
      $region11: #{tpu_custom_call.1} parent=5 // pred_region
        %s125 = ssub.s32 %s12, 1
        // Predicated region
        $region13: #{tpu_custom_call.1} parent=11 // pred_check
          %p126 = pneg %p85
        $region14: #{tpu_custom_call.1} parent=11 // pred_check_branch
          %128 = sbr.rel (%p126) target = $region16
        $region15: #{tpu_custom_call.1} parent=11 // pred_region
          _
        $region16: #{tpu_custom_call.1} parent=11 // pred_fallthru
          _
      $region12: #{tpu_custom_call.1} parent=5 // pred_fallthru
        _
      %p129 = scmp.lt.s32.totalorder %s12, 2
      // Predicated region
      $region17: #{tpu_custom_call.1} parent=5 // pred_check
        %p130 = pneg %p129
      $region18: #{tpu_custom_call.1} parent=5 // pred_check_branch
        %132 = sbr.rel (%p130) target = $region20
      $region19: #{tpu_custom_call.1} parent=5 // pred_region
        // Predicated region
        $region21: #{tpu_custom_call.1} parent=19 // pred_check
          %p133 = pneg %p32
        $region22: #{tpu_custom_call.1} parent=19 // pred_check_branch
          %135 = sbr.rel (%p133) target = $region24
        $region23: #{tpu_custom_call.1} parent=19 // pred_region
          %s136 = smul.u32 16, %s12
          %p137 = scmp.lt.s32.totalorder %s136, 31
          %s138 = scalar_select %p137, %s136, 31
          %s139 = smul.addr %s138, 8
          %s140 = scalar_lea.vmem %s0, %s139
          %s141 = smul.u32 16, %s12
        $region24: #{tpu_custom_call.1} parent=19 // pred_fallthru
          _
        // Predicated region
        $region25: #{tpu_custom_call.1} parent=19 // pred_check
          %p142 = pneg %p58
        $region26: #{tpu_custom_call.1} parent=19 // pred_check_branch
          %144 = sbr.rel (%p142) target = $region28
        $region27: #{tpu_custom_call.1} parent=19 // pred_region
          %s145 = smul.u32 16, %s12
          %p146 = scmp.lt.s32.totalorder %s145, 31
          %s147 = scalar_select %p146, %s145, 31
          %s148 = smul.addr %s147, 8
          %s149 = scalar_lea.vmem %s1, %s148
          %s150 = smul.u32 16, %s12
        $region28: #{tpu_custom_call.1} parent=19 // pred_fallthru
          _
      $region20: #{tpu_custom_call.1} parent=5 // pred_fallthru
        _
      %p151 = scmp.le.s32.totalorder 1, %s12
      %p152 = scmp.lt.s32.totalorder %s12, 3
      %p153 = pnand %p151, %p152
      %p154 = pneg %p153
      // Predicated region
      $region29: #{tpu_custom_call.1} parent=5 // pred_check
        _
      $region30: #{tpu_custom_call.1} parent=5 // pred_check_branch
        %156 = sbr.rel (%p153) target = $region32
      $region31: #{tpu_custom_call.1} parent=5 // pred_region
        %s157 = ssub.s32 %s12, 1
        %s158 = smul.u32 16, %s17
        %p159 = scmp.lt.s32.totalorder %s158, 31
        %s160 = scalar_select %p159, %s158, 31
        %s161 = smul.addr %s160, 8
        %s162 = scalar_lea.vmem %s0, %s161
        %p163 = pneg %p38
        %p164 = pneg %p35
        %s165 = smul.u32 16, %s17
        %p166 = scmp.lt.s32.totalorder %s165, 31
        %s167 = scalar_select %p166, %s165, 31
        %s168 = smul.addr %s167, 8
        %s169 = scalar_lea.vmem %s1, %s168
        %p170 = pneg %p64
        %p171 = pneg %p61
        %p172 = pneg %p85
        %p173 = pneg %p82
        %p174 = pneg %p111
        %p175 = pneg %p108
        %s176 = sand.u32 %s98, 1
        %s177 = scalar_lea.sflag [#allocation3], %s176
        %s178 = sand.u32 %s98, 1
        %s179 = smul.addr %s178, 256
        %s180 = scalar_lea.vmem [#allocation2], %s179
        %s181 = smul.u32 16, %s17
        %p182 = scmp.lt.s32.totalorder %s181, 31
        %s183 = scalar_select %p182, %s181, 31
        %s184 = smul.addr %s183, 8
        %s185 = scalar_lea.vmem %s0, %s184
        %s186 = smul.u32 16, %s17
        %s187 = smul.u32 16, %s17
        %p188 = scmp.lt.s32.totalorder %s187, 31
        %s189 = scalar_select %p188, %s187, 31
        %s190 = smul.addr %s189, 8
        %s191 = scalar_lea.vmem %s1, %s190
        %s192 = smul.u32 16, %s17
        %s193 = smul.u32 16, %s17
        %v194 = vld [vmem:[%s2] sm:$0xff]
        %v195 = vld [vmem:[%s2 + $0x8] sm:$0xff]
        %v196 = vld [vmem:[%s2 + $0x10] sm:$0xff]
        %v197 = vld [vmem:[%s2 + $0x18] sm:$0xff]
        %v198 = vld [vmem:[%s2 + $0x20] sm:$0xff]
        %v199 = vld [vmem:[%s2 + $0x28] sm:$0xff]
        %v200 = vld [vmem:[%s2 + $0x30] sm:$0xff]
        %v201 = vld [vmem:[%s2 + $0x38] sm:$0xff]
        %v202 = vld [vmem:[%s185] sm:$0xff]
        %v203 = vld [vmem:[%s185 + $0x8] sm:$0xff]
        %v204 = vld [vmem:[%s185 + $0x10] sm:$0xff]
        %v205 = vld [vmem:[%s185 + $0x18] sm:$0xff]
        %v206 = vld [vmem:[%s185 + $0x20] sm:$0xff]
        %v207 = vld [vmem:[%s185 + $0x28] sm:$0xff]
        %v208 = vld [vmem:[%s185 + $0x30] sm:$0xff]
        %v209 = vld [vmem:[%s185 + $0x38] sm:$0xff]
        %v210 = vld [vmem:[%s185 + $0x40] sm:$0xff]
        %v211 = vld [vmem:[%s185 + $0x48] sm:$0xff]
        %v212 = vld [vmem:[%s185 + $0x50] sm:$0xff]
        %v213 = vld [vmem:[%s185 + $0x58] sm:$0xff]
        %v214 = vld [vmem:[%s185 + $0x60] sm:$0xff]
        %v215 = vld [vmem:[%s185 + $0x68] sm:$0xff]
        %v216 = vld [vmem:[%s185 + $0x70] sm:$0xff]
        %v217 = vld [vmem:[%s185 + $0x78] sm:$0xff]
        %vm218 = vcmask 523264
        %v220 = vsel %vm218, %v202, 0
        %v223 = vsel %vm218, %v203, 0
        %v226 = vsel %vm218, %v204, 0
        %v229 = vsel %vm218, %v205, 0
        %v232 = vsel %vm218, %v206, 0
        %v235 = vsel %vm218, %v207, 0
        %v238 = vsel %vm218, %v208, 0
        %v241 = vsel %vm218, %v209, 0
        %v244 = vsel %vm218, %v210, 0
        %v247 = vsel %vm218, %v211, 0
        %v250 = vsel %vm218, %v212, 0
        %v253 = vsel %vm218, %v213, 0
        %v256 = vsel %vm218, %v214, 0
        %v259 = vsel %vm218, %v215, 0
        %v262 = vsel %vm218, %v216, 0
        %v265 = vsel %vm218, %v217, 0
        %267 = vmatpush.msra.mxu0 0.0
        %268 = vmatpush.msra.mxu0 0.0
        %269 = vmatpush.msra.mxu0 0.0
        %270 = vmatpush.msra.mxu0 0.0
        %271 = vmatpush.msra.mxu0 0.0
        %272 = vmatpush.msra.mxu0 0.0
        %273 = vmatpush.msra.mxu0 0.0
        %274 = vmatpush.msra.mxu0 0.0
        %275 = vmatpush.msra.mxu0 %v201
        %276 = vmatpush.msra.mxu0 %v200
        %277 = vmatpush.msra.mxu0 %v199
        %278 = vmatpush.msra.mxu0 %v198
        %279 = vmatpush.msra.mxu0 %v197
        %280 = vmatpush.msra.mxu0 %v196
        %281 = vmatpush.msra.mxu0 %v195
        %282 = vmatpush.msra.mxu0 %v194
        %283 = vmatmul.f32.gmra.mxu0 %v220
        %v284 = vpop.f32.mrf.mxu0
        %v285 = vadd.f32 0.0, %v284
        %286 = vmatmul.f32.gmra.mxu0 %v223
        %v287 = vpop.f32.mrf.mxu0
        %v288 = vadd.f32 0.0, %v287
        %289 = vmatmul.f32.gmra.mxu0 %v226
        %v290 = vpop.f32.mrf.mxu0
        %v291 = vadd.f32 0.0, %v290
        %292 = vmatmul.f32.gmra.mxu0 %v229
        %v293 = vpop.f32.mrf.mxu0
        %v294 = vadd.f32 0.0, %v293
        %295 = vmatmul.f32.gmra.mxu0 %v232
        %v296 = vpop.f32.mrf.mxu0
        %v297 = vadd.f32 0.0, %v296
        %298 = vmatmul.f32.gmra.mxu0 %v235
        %v299 = vpop.f32.mrf.mxu0
        %v300 = vadd.f32 0.0, %v299
        %301 = vmatmul.f32.gmra.mxu0 %v238
        %v302 = vpop.f32.mrf.mxu0
        %v303 = vadd.f32 0.0, %v302
        %304 = vmatmul.f32.gmra.mxu0 %v241
        %v305 = vpop.f32.mrf.mxu0
        %v306 = vadd.f32 0.0, %v305
        %307 = vmatmul.f32.gmra.mxu0 %v244
        %v308 = vpop.f32.mrf.mxu0
        %v309 = vadd.f32 0.0, %v308
        %310 = vmatmul.f32.gmra.mxu0 %v247
        %v311 = vpop.f32.mrf.mxu0
        %v312 = vadd.f32 0.0, %v311
        %313 = vmatmul.f32.gmra.mxu0 %v250
        %v314 = vpop.f32.mrf.mxu0
        %v315 = vadd.f32 0.0, %v314
        %316 = vmatmul.f32.gmra.mxu0 %v253
        %v317 = vpop.f32.mrf.mxu0
        %v318 = vadd.f32 0.0, %v317
        %319 = vmatmul.f32.gmra.mxu0 %v256
        %v320 = vpop.f32.mrf.mxu0
        %v321 = vadd.f32 0.0, %v320
        %322 = vmatmul.f32.gmra.mxu0 %v259
        %v323 = vpop.f32.mrf.mxu0
        %v324 = vadd.f32 0.0, %v323
        %325 = vmatmul.f32.gmra.mxu0 %v262
        %v326 = vpop.f32.mrf.mxu0
        %v327 = vadd.f32 0.0, %v326
        %328 = vmatmul.f32.gmra.mxu0 %v265
        %v329 = vpop.f32.mrf.mxu0
        %v330 = vadd.f32 0.0, %v329
        %331 = vdwg.mxu0
        %332 = vst [vmem:[%s180] sm:$0xff] %v285
        %333 = vst [vmem:[%s180 + $0x10] sm:$0xff] %v288
        %334 = vst [vmem:[%s180 + $0x20] sm:$0xff] %v291
        %335 = vst [vmem:[%s180 + $0x30] sm:$0xff] %v294
        %336 = vst [vmem:[%s180 + $0x40] sm:$0xff] %v297
        %337 = vst [vmem:[%s180 + $0x50] sm:$0xff] %v300
        %338 = vst [vmem:[%s180 + $0x60] sm:$0xff] %v303
        %339 = vst [vmem:[%s180 + $0x70] sm:$0xff] %v306
        %340 = vst [vmem:[%s180 + $0x80] sm:$0xff] %v309
        %341 = vst [vmem:[%s180 + $0x90] sm:$0xff] %v312
        %342 = vst [vmem:[%s180 + $0xa0] sm:$0xff] %v315
        %343 = vst [vmem:[%s180 + $0xb0] sm:$0xff] %v318
        %344 = vst [vmem:[%s180 + $0xc0] sm:$0xff] %v321
        %345 = vst [vmem:[%s180 + $0xd0] sm:$0xff] %v324
        %346 = vst [vmem:[%s180 + $0xe0] sm:$0xff] %v327
        %347 = vst [vmem:[%s180 + $0xf0] sm:$0xff] %v330
        %v348 = vld [vmem:[%s191] sm:$0xff]
        %v349 = vld [vmem:[%s191 + $0x8] sm:$0xff]
        %v350 = vld [vmem:[%s191 + $0x10] sm:$0xff]
        %v351 = vld [vmem:[%s191 + $0x18] sm:$0xff]
        %v352 = vld [vmem:[%s191 + $0x20] sm:$0xff]
        %v353 = vld [vmem:[%s191 + $0x28] sm:$0xff]
        %v354 = vld [vmem:[%s191 + $0x30] sm:$0xff]
        %v355 = vld [vmem:[%s191 + $0x38] sm:$0xff]
        %v356 = vld [vmem:[%s191 + $0x40] sm:$0xff]
        %v357 = vld [vmem:[%s191 + $0x48] sm:$0xff]
        %v358 = vld [vmem:[%s191 + $0x50] sm:$0xff]
        %v359 = vld [vmem:[%s191 + $0x58] sm:$0xff]
        %v360 = vld [vmem:[%s191 + $0x60] sm:$0xff]
        %v361 = vld [vmem:[%s191 + $0x68] sm:$0xff]
        %v362 = vld [vmem:[%s191 + $0x70] sm:$0xff]
        %v363 = vld [vmem:[%s191 + $0x78] sm:$0xff]
        %v365 = vsel %vm218, %v348, 0
        %v368 = vsel %vm218, %v349, 0
        %v371 = vsel %vm218, %v350, 0
        %v374 = vsel %vm218, %v351, 0
        %v377 = vsel %vm218, %v352, 0
        %v380 = vsel %vm218, %v353, 0
        %v383 = vsel %vm218, %v354, 0
        %v386 = vsel %vm218, %v355, 0
        %v389 = vsel %vm218, %v356, 0
        %v392 = vsel %vm218, %v357, 0
        %v395 = vsel %vm218, %v358, 0
        %v398 = vsel %vm218, %v359, 0
        %v401 = vsel %vm218, %v360, 0
        %v404 = vsel %vm218, %v361, 0
        %v407 = vsel %vm218, %v362, 0
        %v410 = vsel %vm218, %v363, 0
        %412 = vmatpush.msra.mxu0 0.0
        %413 = vmatpush.msra.mxu0 0.0
        %414 = vmatpush.msra.mxu0 0.0
        %415 = vmatpush.msra.mxu0 0.0
        %416 = vmatpush.msra.mxu0 0.0
        %417 = vmatpush.msra.mxu0 0.0
        %418 = vmatpush.msra.mxu0 0.0
        %419 = vmatpush.msra.mxu0 0.0
        %420 = vmatpush.msra.mxu0 %v201
        %421 = vmatpush.msra.mxu0 %v200
        %422 = vmatpush.msra.mxu0 %v199
        %423 = vmatpush.msra.mxu0 %v198
        %424 = vmatpush.msra.mxu0 %v197
        %425 = vmatpush.msra.mxu0 %v196
        %426 = vmatpush.msra.mxu0 %v195
        %427 = vmatpush.msra.mxu0 %v194
        %428 = vmatmul.f32.gmra.mxu0 %v365
        %v429 = vpop.f32.mrf.mxu0
        %v430 = vadd.f32 0.0, %v429
        %431 = vmatmul.f32.gmra.mxu0 %v368
        %v432 = vpop.f32.mrf.mxu0
        %v433 = vadd.f32 0.0, %v432
        %434 = vmatmul.f32.gmra.mxu0 %v371
        %v435 = vpop.f32.mrf.mxu0
        %v436 = vadd.f32 0.0, %v435
        %437 = vmatmul.f32.gmra.mxu0 %v374
        %v438 = vpop.f32.mrf.mxu0
        %v439 = vadd.f32 0.0, %v438
        %440 = vmatmul.f32.gmra.mxu0 %v377
        %v441 = vpop.f32.mrf.mxu0
        %v442 = vadd.f32 0.0, %v441
        %443 = vmatmul.f32.gmra.mxu0 %v380
        %v444 = vpop.f32.mrf.mxu0
        %v445 = vadd.f32 0.0, %v444
        %446 = vmatmul.f32.gmra.mxu0 %v383
        %v447 = vpop.f32.mrf.mxu0
        %v448 = vadd.f32 0.0, %v447
        %449 = vmatmul.f32.gmra.mxu0 %v386
        %v450 = vpop.f32.mrf.mxu0
        %v451 = vadd.f32 0.0, %v450
        %452 = vmatmul.f32.gmra.mxu0 %v389
        %v453 = vpop.f32.mrf.mxu0
        %v454 = vadd.f32 0.0, %v453
        %455 = vmatmul.f32.gmra.mxu0 %v392
        %v456 = vpop.f32.mrf.mxu0
        %v457 = vadd.f32 0.0, %v456
        %458 = vmatmul.f32.gmra.mxu0 %v395
        %v459 = vpop.f32.mrf.mxu0
        %v460 = vadd.f32 0.0, %v459
        %461 = vmatmul.f32.gmra.mxu0 %v398
        %v462 = vpop.f32.mrf.mxu0
        %v463 = vadd.f32 0.0, %v462
        %464 = vmatmul.f32.gmra.mxu0 %v401
        %v465 = vpop.f32.mrf.mxu0
        %v466 = vadd.f32 0.0, %v465
        %467 = vmatmul.f32.gmra.mxu0 %v404
        %v468 = vpop.f32.mrf.mxu0
        %v469 = vadd.f32 0.0, %v468
        %470 = vmatmul.f32.gmra.mxu0 %v407
        %v471 = vpop.f32.mrf.mxu0
        %v472 = vadd.f32 0.0, %v471
        %473 = vmatmul.f32.gmra.mxu0 %v410
        %v474 = vpop.f32.mrf.mxu0
        %v475 = vadd.f32 0.0, %v474
        %476 = vdwg.mxu0
        %477 = vst [vmem:[%s180 + $0x8] sm:$0xff] %v430
        %478 = vst [vmem:[%s180 + $0x18] sm:$0xff] %v433
        %479 = vst [vmem:[%s180 + $0x28] sm:$0xff] %v436
        %480 = vst [vmem:[%s180 + $0x38] sm:$0xff] %v439
        %481 = vst [vmem:[%s180 + $0x48] sm:$0xff] %v442
        %482 = vst [vmem:[%s180 + $0x58] sm:$0xff] %v445
        %483 = vst [vmem:[%s180 + $0x68] sm:$0xff] %v448
        %484 = vst [vmem:[%s180 + $0x78] sm:$0xff] %v451
        %485 = vst [vmem:[%s180 + $0x88] sm:$0xff] %v454
        %486 = vst [vmem:[%s180 + $0x98] sm:$0xff] %v457
        %487 = vst [vmem:[%s180 + $0xa8] sm:$0xff] %v460
        %488 = vst [vmem:[%s180 + $0xb8] sm:$0xff] %v463
        %489 = vst [vmem:[%s180 + $0xc8] sm:$0xff] %v466
        %490 = vst [vmem:[%s180 + $0xd8] sm:$0xff] %v469
        %491 = vst [vmem:[%s180 + $0xe8] sm:$0xff] %v472
        %492 = vst [vmem:[%s180 + $0xf8] sm:$0xff] %v475
        %s493 = sand.u32 %s98, 1
        %s494 = scalar_lea.sflag [#allocation3], %s493
        %s495 = sand.u32 %s98, 1
        %s496 = smul.addr %s495, 256
        %s497 = scalar_lea.vmem [#allocation2], %s496
        // Predicated region
        $region33: #{tpu_custom_call.1} parent=31 // pred_check
          %p498 = pneg %p108
        $region34: #{tpu_custom_call.1} parent=31 // pred_check_branch
          %500 = sbr.rel (%p498) target = $region36
        $region35: #{tpu_custom_call.1} parent=31 // pred_region
          %s501 = smul.u32 16, %s17
          %503 = vsyncadd %s494, 0
          %s504 = smul.addr %s501, 2
          %s505 = smul.addr %s504, 8
          %s506 = scalar_lea.hbm %s3, %s505
          %s507 = sshll.u32 %s497, 4
          %s508 = int_to_ptr.vmem [resolvable:$true] %s507
          %s509 = sshll.u32 %s506, 4
          %s510 = int_to_ptr.hbm [resolvable:$true] %s509
          %515 = dma.vmem_to_hbm [thread:$0]  %s508, 4096, %s510, %s494, 256, 256, 16
        $region36: #{tpu_custom_call.1} parent=31 // pred_fallthru
          _
      $region32: #{tpu_custom_call.1} parent=5 // pred_fallthru
        _
      %p516 = scmp.le.s32.totalorder 2, %s12
      // Predicated region
      $region37: #{tpu_custom_call.1} parent=5 // pred_check
        %p517 = pneg %p516
      $region38: #{tpu_custom_call.1} parent=5 // pred_check_branch
        %519 = sbr.rel (%p517) target = $region40
      $region39: #{tpu_custom_call.1} parent=5 // pred_region
        %s520 = ssub.s32 %s12, 2
        // Predicated region
        $region41: #{tpu_custom_call.1} parent=39 // pred_check
          %p521 = pneg %p114
        $region42: #{tpu_custom_call.1} parent=39 // pred_check_branch
          %523 = sbr.rel (%p521) target = $region44
        $region43: #{tpu_custom_call.1} parent=39 // pred_region
          %s524 = sand.u32 %s99, 1
          %s525 = scalar_lea.sflag [#allocation3], %s524
          %s526 = sand.u32 %s99, 1
          %s527 = smul.addr %s526, 256
          %s528 = scalar_lea.vmem [#allocation2], %s527
          %530 = dma.done %s525, 4096
        $region44: #{tpu_custom_call.1} parent=39 // pred_fallthru
          _
      $region40: #{tpu_custom_call.1} parent=5 // pred_fallthru
        _
    $region6: #{tpu_custom_call.1} parent=1 // loop_footer
      %s16 = sadd.s32 1, %s12
    $region7: #{tpu_custom_call.1} parent=1 // loop_footer_branch
      %11 = sbr.rel target = $region3
    $region8: #{tpu_custom_call.1} parent=1 // loop_exit
      _
    %531 = vsyncpa [#allocation3], 1
    %s532 = scalar_lea.sflag [#allocation3], 1
    %533 = vsyncpa %s532, 1

</llo_original>
